<compile_context>
chip_gen: v7x
topology: tpu7x:2x2x1
jax: 0.10.0
libtpu: 0.0.40
codegen_flags: <defaults>
</compile_context>

<pallas_src>
import jax
import jax.numpy as jnp
from jax.experimental import pallas as pl
from jax.experimental.pallas import tpu as pltpu

LANES = 128                       # vreg lane width (fast axis)
MAX_TILE_BYTES = 2 * 1024 * 1024  # ~2 MiB per (tile_rows, 128) buffer
SMALL_N_THRESHOLD = 1 << 15       # below this, fused XLA elementwise wins


def _sublane_min(dtype):
    # Minimum second-minor tiling: (8,128) f32, (16,128) bf16, (32,128) int8.
    return 8 * (4 // jnp.dtype(dtype).itemsize)


def linear_kernel(w_ref, b_ref, x_ref, o_ref):
    # w_ref [1,1] / b_ref [1] live in SMEM; x_ref / o_ref are VMEM tiles.
    w = w_ref[0, 0]
    b = b_ref[0]
    # Elementwise FMA on the VPU; explicit cast so mixed dtypes store cleanly.
    o_ref[...] = (x_ref[...] * w + b).astype(o_ref.dtype)


def liner_regression_forward(x, weight, bias, *, force_pallas=False):
    """x: [N, 1], weight: [1, 1], bias: [1] -> [N, 1]; same math as nn.Linear(1, 1)."""
    n, f = x.shape
    assert f == 1 and weight.shape == (1, 1) and bias.shape == (1,)
    dtype = x.dtype
    w = weight.astype(dtype)
    b = bias.astype(dtype)

    # Small-N fast path: launch + layout plumbing dominate for tiny batches.
    if not force_pallas and n < SMALL_N_THRESHOLD:
        return x * w[0, 0] + b[0]

    itemsize = jnp.dtype(dtype).itemsize
    sub = _sublane_min(dtype)
    max_tile_rows = max(sub, (MAX_TILE_BYTES // (LANES * itemsize)) // sub * sub)

    # --- lane-dense layout plumbing ------------------------------------------
    rows = pl.cdiv(n, LANES)
    padded = rows * LANES
    if padded == n:
        x2d = x.reshape(rows, LANES)                       # metadata-only reshape
    else:
        # Ragged N: pad by at most LANES-1 elements (one extra copy, unavoidable).
        x2d = jnp.pad(x.reshape(-1), (0, padded - n)).reshape(rows, LANES)

    # Tile selection: whole array if it fits one tile, else large (8,128)-legal
    # blocks; the ragged last grid block is masked by Pallas automatically.
    tile_rows = rows if rows <= max_tile_rows else max_tile_rows
    grid = (pl.cdiv(rows, tile_rows),)

    out2d = pl.pallas_call(
        linear_kernel,
        out_shape=jax.ShapeDtypeStruct((rows, LANES), dtype),
        grid=grid,
        in_specs=[
            pl.BlockSpec(memory_space=pltpu.SMEM),               # weight [1,1]
            pl.BlockSpec(memory_space=pltpu.SMEM),               # bias   [1]
            pl.BlockSpec((tile_rows, LANES), lambda i: (i, 0)),  # x tile
        ],
        out_specs=pl.BlockSpec((tile_rows, LANES), lambda i: (i, 0)),
        compiler_params=pltpu.CompilerParams(
            # TODO(synk): on v7x, confirm both TCs are active; if not, switch to
            # (pltpu.CORE_PARALLEL,) — plain "parallel" is a no-op on v5e/v6e.
            dimension_semantics=("parallel",),
        ),
        cost_estimate=pl.CostEstimate(
            flops=2 * padded,
            transcendentals=0,
            bytes_accessed=2 * padded * itemsize,
        ),
    )(w, b, x2d)

    # Restore [N, 1]; aligned N needs no slice (no extra HBM pass).
    if padded == n:
        return out2d.reshape(n, 1)
    return out2d.reshape(-1)[:n].reshape(n, 1)


if __name__ == "__main__":
    key = jax.random.PRNGKey(0)
    kx, kw, kb, kx2 = jax.random.split(key, 4)

    # Parameters with the shapes of nn.Linear(1, 1).
    weight = jax.random.normal(kw, (1, 1), dtype=jnp.float32)
    bias = jax.random.normal(kb, (1,), dtype=jnp.float32)

    # 1) Tiny batch matching the module spec; force the Pallas path to make
    #    sure the kernel itself compiles and runs.
    x_small = jax.random.normal(kx, (8, 1), dtype=jnp.float32)
    out_small = liner_regression_forward(x_small, weight, bias, force_pallas=True)
    jax.block_until_ready(out_small)
    ref_small = x_small * weight[0, 0] + bias[0]
    assert out_small.shape == (8, 1)
    assert jnp.allclose(out_small, ref_small, atol=1e-6), "small-case mismatch"

    # 2) Ragged multi-tile case: 2 grid steps, masked final block, aligned-free
    #    path not taken (exercises the pad/slice branch once).
    n_big = 4096 * 128 + 3
    x_big = jax.random.normal(kx2, (n_big, 1), dtype=jnp.float32)
    out_big = liner_regression_forward(x_big, weight, bias)
    jax.block_until_ready(out_big)
    ref_big = x_big * weight[0, 0] + bias[0]
    assert out_big.shape == (n_big, 1)
    assert jnp.allclose(out_big, ref_big, atol=1e-5), "big-case mismatch"

    print("KERNEL_OK")
</pallas_src>

<mosaic_0001>
module attributes {stable_mosaic.version = 11 : i64} {
  func.func @linear_kernel(%arg0: i32, %arg1: memref<1x1xf32, #tpu.memory_space<smem>>, %arg2: memref<1xf32, #tpu.memory_space<smem>>, %arg3: memref<1x128xf32, #tpu.memory_space<vmem>>, %arg4: memref<1x128xf32, #tpu.memory_space<vmem>>) attributes {dimension_semantics = [#tpu.dimension_semantics<parallel>], iteration_bounds = array<i64: 1>, scalar_prefetch = 0 : i64, scratch_operands = 0 : i64, tpu.core_type = #tpu.core_type<tc>, window_params = [{transform_indices = @transform_0, window_bounds = array<i64: 1, 1>}, {transform_indices = @transform_1, window_bounds = array<i64: 1>}, {transform_indices = @transform_2, window_bounds = array<i64: 1, 128>}, {transform_indices = @transform_3, window_bounds = array<i64: 1, 128>}]} {
    %c0 = arith.constant 0 : index
    %c0_0 = arith.constant 0 : index
    %0 = memref.load %arg1[%c0, %c0_0] : memref<1x1xf32, #tpu.memory_space<smem>>
    %c0_1 = arith.constant 0 : index
    %1 = memref.load %arg2[%c0_1] : memref<1xf32, #tpu.memory_space<smem>>
    %c0_2 = arith.constant 0 : index
    %c0_3 = arith.constant 0 : index
    %2 = vector.load %arg3[%c0_2, %c0_3] : memref<1x128xf32, #tpu.memory_space<vmem>>, vector<1x128xf32>
    %3 = vector.broadcast %0 : f32 to vector<1x128xf32>
    %4 = arith.mulf %2, %3 : vector<1x128xf32>
    %5 = vector.broadcast %1 : f32 to vector<1x128xf32>
    %6 = arith.addf %4, %5 : vector<1x128xf32>
    %c0_4 = arith.constant 0 : index
    %c0_5 = arith.constant 0 : index
    %7 = vector.load %arg4[%c0_4, %c0_5] : memref<1x128xf32, #tpu.memory_space<vmem>>, vector<1x128xf32>
    tpu.vector_store %arg4[%c0_4, %c0_5], %6 {strides = array<i32>} : memref<1x128xf32, #tpu.memory_space<vmem>>, vector<1x128xf32>,
    return
  }
  func.func @transform_0(%arg0: i32) -> (i32, i32) {
    %c0_i32 = arith.constant 0 : i32
    %c0_i32_0 = arith.constant 0 : i32
    %c0_i32_1 = arith.constant 0 : i32
    return %c0_i32, %c0_i32_0 : i32, i32
  }
  func.func @transform_1(%arg0: i32) -> i32 {
    %c0_i32 = arith.constant 0 : i32
    %c0_i32_0 = arith.constant 0 : i32
    return %c0_i32 : i32
  }
  func.func @transform_2(%arg0: i32) -> (i32, i32) {
    %c0_i32 = arith.constant 0 : i32
    %c0_i32_0 = arith.constant 0 : i32
    return %arg0, %c0_i32 : i32, i32
  }
  func.func @transform_3(%arg0: i32) -> (i32, i32) {
    %c0_i32 = arith.constant 0 : i32
    %c0_i32_0 = arith.constant 0 : i32
    return %arg0, %c0_i32 : i32, i32
  }
}

</mosaic_0001>

<llo_original>
// kernel: tpu_custom_call.1
$region0: #{tpu_custom_call.1}
  #allocation0 [shape = 'u32[]', space=smem, size = 0x4, offset = 0x4, fixed_abs, tag = 'smem constant byte address 0x4 - core index']
  #allocation1 [shape = 'u32[144,128]{1,0:T(1,128)}', space=vmem, size = 0x12000, scoped, tag = 'internal scratch']
  #allocation2 [shape = 'f32[1,1]{1,0:T(1,128)S(6)}', space=smem, size = 0x200, scoped, tag = 'scoped memory for tpu_custom_call.1']
  #allocation3 [shape = 'f32[1]{0:T(128)S(6)}', space=smem, size = 0x200, scoped, tag = 'scoped memory for tpu_custom_call.1']
  %s0 = inlined_call_operand.<no memory space> [shape: f32[1,1], index: 0, kind: input, shape index: {}]
  %s1 = inlined_call_operand.<no memory space> [shape: f32[1], index: 1, kind: input, shape index: {}]
  %s2 = inlined_call_operand.vmem [shape: f32[1,128], index: 2, kind: input, shape index: {}]
  %s3 = inlined_call_operand.hbm [shape: f32[1,128], index: 3, kind: output, shape index: {}]
  %s4 = sld [smem:[#allocation0]]
  $region22: #{tpu_custom_call.1} parent=0
    _
  %s6 = ssub.s32 1, %s4
  %s7 = scalar_select 0, %s6, %s4
  %8 = sst [smem:[#allocation2]] %s0
  %9 = sst [smem:[#allocation3]] %s1
  $region1: #{tpu_custom_call.1} parent=0
    #allocation4 [shape = 'u8[512]{0}', space=vmem, size = 0x400, scoped, tag = 'output window, operand 0, single buffered']
    #allocation5 [shape = 's32[1]{0}', space=sflag, size = 0x4, scoped, tag = 'scoped memory for tpu_custom_call.1']
    %10 = vsyncpa [#allocation5], 0
    // Predicated region
    $region2: #{tpu_custom_call.1} parent=1 // pred_check
      _
    $region3: #{tpu_custom_call.1} parent=1 // pred_check_branch
      %12 = sbr.rel (0) target = $region5
    $region4: #{tpu_custom_call.1} parent=1 // pred_region
      _
    $region5: #{tpu_custom_call.1} parent=1 // pred_fallthru
      _
    // Predicated region
    $region6: #{tpu_custom_call.1} parent=1 // pred_check
      _
    $region7: #{tpu_custom_call.1} parent=1 // pred_check_branch
      %14 = sbr.rel (0) target = $region9
    $region8: #{tpu_custom_call.1} parent=1 // pred_region
      _
    $region9: #{tpu_custom_call.1} parent=1 // pred_fallthru
      _
    // Predicated region
    $region10: #{tpu_custom_call.1} parent=1 // pred_check
      _
    $region11: #{tpu_custom_call.1} parent=1 // pred_check_branch
      %16 = sbr.rel (0) target = $region13
    $region12: #{tpu_custom_call.1} parent=1 // pred_region
      _
    $region13: #{tpu_custom_call.1} parent=1 // pred_fallthru
      _
    %s17 = sld [smem:[#allocation2]]
    %s18 = sld [smem:[#allocation3]]
    %v19 = vld [vmem:[%s2] sm:$0x1]
    %v20 = vstv %s17
    %v21 = vmul.f32 %v19, %v20
    %v22 = vstv %s18
    %v23 = vadd.f32 %v21, %v22
    %24 = vst [vmem:[#allocation4] sm:$0x1] %v23
    // Predicated region
    $region14: #{tpu_custom_call.1} parent=1 // pred_check
      _
    $region15: #{tpu_custom_call.1} parent=1 // pred_check_branch
      %26 = sbr.rel (0) target = $region17
    $region16: #{tpu_custom_call.1} parent=1 // pred_region
      %s28 = ssub.s32 16, 16
      %29 = vsyncadd [#allocation5], %s28
      %s31 = sshll.u32 [#allocation4], 4
      %s32 = int_to_ptr.vmem [resolvable:$true] %s31
      %34 = dma.vmem_to_hbm [thread:$0]  %s32, 16, %s3, [#allocation5]
    $region17: #{tpu_custom_call.1} parent=1 // pred_fallthru
      _
    // Predicated region
    $region18: #{tpu_custom_call.1} parent=1 // pred_check
      _
    $region19: #{tpu_custom_call.1} parent=1 // pred_check_branch
      %36 = sbr.rel (0) target = $region21
    $region20: #{tpu_custom_call.1} parent=1 // pred_region
      %37 = dma.done [#allocation5], 16
    $region21: #{tpu_custom_call.1} parent=1 // pred_fallthru
      _
    %38 = vsyncpa [#allocation5], 1

</llo_original>
